<compile_context>
chip_gen: v7x
topology: tpu7x:2x2x1
jax: 0.10.0
libtpu: 0.0.40
codegen_flags: <defaults>
</compile_context>

<pallas_src>
import functools

import numpy as np
import jax
import jax.numpy as jnp
from jax import lax
from jax.experimental import pallas as pl
from jax.experimental.pallas import tpu as pltpu

EPS = 1e-08
NUM_CLASS = 7
_LANES = 128
_SUBLANES = 8
_PS_ROWS = 3            # per-sample rows: 0 = ce, 1 = pred_tmp, 2 = label
_NEG_BIG = -1e30        # masks padded class rows out of the softmax


def _round_up(x, m):
    return ((x + m - 1) // m) * m


# ----------------------------------------------------------------------------
# Pass 1: per-class batch statistics + per-sample CE / true-class probability.
# ----------------------------------------------------------------------------
def _stats_kernel(pred_ref, lbl_ref, ps_ref, stats_ref, sum_acc, sq_acc,
                  *, num_class, n_total, tile_n, c_pad):
    i = pl.program_id(0)
    n_tiles = pl.num_programs(0)

    @pl.when(i == 0)
    def _init():
        sum_acc[...] = jnp.zeros_like(sum_acc)
        sq_acc[...] = jnp.zeros_like(sq_acc)

    pred = pred_ref[...].astype(jnp.float32)                   # [c_pad, T]
    lbl = lbl_ref[...]                                         # [1, T] int32

    cls = lax.broadcasted_iota(jnp.int32, (c_pad, tile_n), 0)  # class id / sublane
    pred = jnp.where(cls < num_class, pred, _NEG_BIG)          # mask padded rows

    lane = lax.broadcasted_iota(jnp.int32, (1, tile_n), 1)
    valid = (i * tile_n + lane) < n_total                      # real samples only
    validf = valid.astype(jnp.float32)                         # [1, T]

    # Softmax over the class (sublane) axis.
    m = jnp.max(pred, axis=0, keepdims=True)                   # [1, T]
    e = jnp.exp(pred - m)                                      # [c_pad, T]
    denom = jnp.sum(e, axis=0, keepdims=True)                  # [1, T]
    y_pred = jnp.clip(e / denom, EPS, 1.0 - EPS)               # torch.clamp

    # One-hot as a reusable predicate (no [N, C] one-hot materialized).
    is_true = (cls == lbl).astype(jnp.float32)                 # [c_pad, T]
    pred_tmp = jnp.sum(is_true * y_pred, axis=0, keepdims=True)     # [1, T]
    true_logit = jnp.sum(is_true * pred, axis=0, keepdims=True)     # [1, T]
    ce = (m + jnp.log(denom)) - true_logit                     # F.cross_entropy per-sample

    # Per-class batch accumulators (full lane width; lanes reduced once at end).
    ypm = y_pred * validf
    sum_acc[...] += ypm
    sq_acc[...] += ypm * ypm

    # Lane-dense per-sample slab: row 0 = ce, row 1 = pred_tmp, row 2 = label.
    row = lax.broadcasted_iota(jnp.int32, (_PS_ROWS, tile_n), 0)
    lblf = lbl.astype(jnp.float32)
    ps_ref[...] = jnp.where(row == 0, ce, jnp.where(row == 1, pred_tmp, lblf))

    @pl.when(i == n_tiles - 1)
    def _finalize():
        cls_sum = jnp.sum(sum_acc[...], axis=1, keepdims=True)  # [c_pad, 1]
        cls_sq = jnp.sum(sq_acc[...], axis=1, keepdims=True)    # [c_pad, 1]
        n = jnp.float32(n_total)
        avg = cls_sum / n
        # torch.std default is unbiased (ddof=1); guard n==1 (torch gives NaN,
        # we return 0 — documented divergence).
        var = (cls_sq - n * avg * avg) / jnp.float32(max(n_total - 1, 1))
        std = jnp.sqrt(jnp.maximum(var, 0.0))
        lane128 = lax.broadcasted_iota(jnp.int32, (c_pad, _LANES), 1)
        # Compose the stats slab in vregs; single full-width store.
        stats_ref[...] = jnp.where(lane128 == 0, avg,
                                   jnp.where(lane128 == 1, std, 0.0))


# ----------------------------------------------------------------------------
# Pass 2: confidence pruning mask + weighted cross-entropy loss.
# ----------------------------------------------------------------------------
def _loss_kernel(ps_ref, stats_ref, mask_ref, loss_ref, acc_ref,
                 *, n_total, tile_n, c_pad):
    i = pl.program_id(0)
    n_tiles = pl.num_programs(0)

    @pl.when(i == 0)
    def _init():
        acc_ref[...] = jnp.zeros_like(acc_ref)

    ps = ps_ref[...]                                           # [3, T]
    ce = ps[0:1, :]
    pred_tmp = ps[1:2, :]
    lbl = ps[2:3, :].astype(jnp.int32)

    stats = stats_ref[...]                                     # [c_pad, 128]
    avg_col = stats[:, 0:1]                                    # avg_post, [c_pad, 1]

    lane = lax.broadcasted_iota(jnp.int32, (1, tile_n), 1)
    valid = (i * tile_n + lane) < n_total

    # avg_post[label] via label-match predicate (no gather / matmul).
    cls = lax.broadcasted_iota(jnp.int32, (c_pad, tile_n), 0)
    match = (cls == lbl).astype(jnp.float32)
    avg_ref = jnp.sum(match * avg_col, axis=0, keepdims=True)  # [1, T]

    conf = jnp.logical_and(pred_tmp >= avg_ref, valid).astype(jnp.float32)
    mask_ref[...] = conf                                       # lane-dense per tile

    validf = valid.astype(jnp.float32)
    row = lax.broadcasted_iota(jnp.int32, (_SUBLANES, tile_n), 0)
    acc_ref[...] += jnp.where(row == 0, conf,                  # confident count
                     jnp.where(row == 1, ce * conf,            # confident CE sum
                      jnp.where(row == 2, ce * validf, 0.0)))  # full-batch CE sum

    @pl.when(i == n_tiles - 1)
    def _finalize():
        sums = jnp.sum(acc_ref[...], axis=1, keepdims=True)    # [8, 1]
        n_conf = sums[0, 0]
        loss_conf = sums[1, 0] / jnp.maximum(n_conf, 1.0)      # mean over confident
        loss_all = sums[2, 0] / jnp.float32(n_total)           # fallback: full batch
        loss = jnp.where(n_conf > 0.0, loss_conf, loss_all)
        lane128 = lax.broadcasted_iota(jnp.int32, (1, _LANES), 1)
        loss_ref[...] = jnp.where(lane128 == 0, loss, 0.0)


# ----------------------------------------------------------------------------
# Wrapper
# ----------------------------------------------------------------------------
def sai_weighted_cce(prediction, target_label, num_class=NUM_CLASS, tile_n=2048):
    """Device-side forward of Sai_weighted_CCE.

    Returns (weighted_loss, confident_mask, avg_post, std_post) as device
    arrays.  Dynamic-size confident/noisy index lists are recovered off the hot
    path with `confident_noisy_indices(confident_mask)`.
    """
    n, c = prediction.shape
    assert c == num_class, f"prediction has {c} classes, expected {num_class}"
    assert n >= 1
    c_pad = _round_up(c, _SUBLANES)

    tile_n = max(_LANES, _round_up(min(tile_n, _round_up(n, _LANES)), _LANES))
    n_pad = _round_up(n, tile_n)
    n_tiles = n_pad // tile_n

    # Lane-dense [C_pad, N_pad] layout; padding value is irrelevant (masked
    # in-kernel by class / lane validity), so plain zero padding is used.
    pred_t = jnp.pad(jnp.transpose(prediction), ((0, c_pad - c), (0, n_pad - n)))
    labels = jnp.pad(target_label.astype(jnp.int32).reshape(1, n),
                     ((0, 0), (0, n_pad - n)))

    cparams = pltpu.CompilerParams(
        dimension_semantics=("arbitrary",),          # batch axis carries accumulators
        vmem_limit_bytes=32 * 1024 * 1024,
    )

    stats_kernel = functools.partial(
        _stats_kernel, num_class=num_class, n_total=n, tile_n=tile_n, c_pad=c_pad)
    per_sample, stats = pl.pallas_call(
        stats_kernel,
        out_shape=(jax.ShapeDtypeStruct((_PS_ROWS, n_pad), jnp.float32),
                   jax.ShapeDtypeStruct((c_pad, _LANES), jnp.float32)),
        grid_spec=pltpu.PrefetchScalarGridSpec(
            num_scalar_prefetch=0,
            grid=(n_tiles,),
            in_specs=[pl.BlockSpec((c_pad, tile_n), lambda i: (0, i)),
                      pl.BlockSpec((1, tile_n), lambda i: (0, i))],
            out_specs=(pl.BlockSpec((_PS_ROWS, tile_n), lambda i: (0, i)),
                       pl.BlockSpec((c_pad, _LANES), lambda i: (0, 0))),
            scratch_shapes=[pltpu.VMEM((c_pad, tile_n), jnp.float32),
                            pltpu.VMEM((c_pad, tile_n), jnp.float32)]),
        compiler_params=cparams,
    )(pred_t, labels)

    loss_kernel = functools.partial(
        _loss_kernel, n_total=n, tile_n=tile_n, c_pad=c_pad)
    mask_f, loss_slab = pl.pallas_call(
        loss_kernel,
        out_shape=(jax.ShapeDtypeStruct((1, n_pad), jnp.float32),
                   jax.ShapeDtypeStruct((1, _LANES), jnp.float32)),
        grid_spec=pltpu.PrefetchScalarGridSpec(
            num_scalar_prefetch=0,
            grid=(n_tiles,),
            in_specs=[pl.BlockSpec((_PS_ROWS, tile_n), lambda i: (0, i)),
                      pl.BlockSpec((c_pad, _LANES), lambda i: (0, 0))],
            out_specs=(pl.BlockSpec((1, tile_n), lambda i: (0, i)),
                       pl.BlockSpec((1, _LANES), lambda i: (0, 0))),
            scratch_shapes=[pltpu.VMEM((_SUBLANES, tile_n), jnp.float32)]),
        compiler_params=cparams,
    )(per_sample, stats)

    weighted_loss = loss_slab[0, 0]
    avg_post = stats[:c, 0]
    std_post = stats[:c, 1]
    confident_mask = mask_f[0, :n] > 0.5
    return weighted_loss, confident_mask, avg_post, std_post


def confident_noisy_indices(confident_mask):
    """Host-side helper (blocking): dynamic index lists from the static mask."""
    m = np.asarray(confident_mask)
    return np.nonzero(m)[0], np.nonzero(~m)[0]


# ----------------------------------------------------------------------------
# Pure-numpy reference of the PyTorch forward (for correctness checking only).
# ----------------------------------------------------------------------------
def _reference(prediction, target_label, num_class=NUM_CLASS):
    pred = np.asarray(prediction, dtype=np.float32)
    tgt = np.asarray(target_label)
    n, _ = pred.shape
    y_true = np.eye(num_class, dtype=np.float32)[tgt]
    m = pred.max(axis=1, keepdims=True)
    e = np.exp(pred - m)
    y_pred = e / e.sum(axis=1, keepdims=True)
    y_pred = np.clip(y_pred, EPS, 1.0 - EPS)
    pred_tmp = (y_true * y_pred).sum(axis=1)
    avg_post = y_pred.mean(axis=0)
    std_post = y_pred.std(axis=0, ddof=1)
    margin = pred_tmp - avg_post[tgt]
    conf = margin >= 0.0
    lse = (m + np.log(e.sum(axis=1, keepdims=True))).reshape(-1)
    ce = lse - (y_true * pred).sum(axis=1)
    loss = ce[conf].mean() if conf.any() else ce.mean()
    return loss, conf, avg_post, std_post, margin


def _check(prediction, target_label, tile_n):
    loss, mask, avg_post, std_post = sai_weighted_cce(
        prediction, target_label, tile_n=tile_n)
    jax.block_until_ready((loss, mask, avg_post, std_post))
    ref_loss, ref_conf, ref_avg, ref_std, ref_margin = _reference(
        prediction, target_label)
    np.testing.assert_allclose(np.asarray(avg_post), ref_avg, rtol=1e-5, atol=1e-6)
    np.testing.assert_allclose(np.asarray(std_post), ref_std, rtol=1e-4, atol=1e-6)
    # Confidence is an exact-tie-sensitive comparison; only assert it where the
    # reference margin is clearly away from the boundary.
    clear = np.abs(ref_margin) > 1e-6
    np.testing.assert_array_equal(np.asarray(mask)[clear], ref_conf[clear])
    if np.all(clear):
        np.testing.assert_allclose(np.asarray(loss), ref_loss, rtol=1e-5, atol=1e-5)


if __name__ == "__main__":
    key = jax.random.PRNGKey(0)
    k1, k2, k3, k4 = jax.random.split(key, 4)

    # Small single-tile case.
    pred_small = jax.random.normal(k1, (8, NUM_CLASS), dtype=jnp.float32)
    lbl_small = jax.random.randint(k2, (8,), 0, NUM_CLASS, dtype=jnp.int32)
    _check(pred_small, lbl_small, tile_n=2048)

    # Multi-tile case (3 batch tiles of 128, last tile partially valid).
    pred_big = jax.random.normal(k3, (300, NUM_CLASS), dtype=jnp.float32)
    lbl_big = jax.random.randint(k4, (300,), 0, NUM_CLASS, dtype=jnp.int32)
    _check(pred_big, lbl_big, tile_n=128)

    print("KERNEL_OK")
</pallas_src>

<mosaic_0001>
module attributes {stable_mosaic.version = 11 : i64} {
  func.func @_stats_kernel(%arg0: i32, %arg1: memref<8x128xf32, #tpu.memory_space<vmem>>, %arg2: memref<1x128xi32, #tpu.memory_space<vmem>>, %arg3: memref<3x128xf32, #tpu.memory_space<vmem>>, %arg4: memref<8x128xf32, #tpu.memory_space<vmem>>, %arg5: memref<8x128xf32, #tpu.memory_space<vmem>>, %arg6: memref<8x128xf32, #tpu.memory_space<vmem>>) attributes {dimension_semantics = [#tpu.dimension_semantics<arbitrary>], iteration_bounds = array<i64: 1>, scalar_prefetch = 0 : i64, scratch_operands = 2 : i64, tpu.core_type = #tpu.core_type<tc>, window_params = [{transform_indices = @transform_0, window_bounds = array<i64: 8, 128>}, {transform_indices = @transform_1, window_bounds = array<i64: 1, 128>}, {transform_indices = @transform_2, window_bounds = array<i64: 3, 128>}, {pipeline_mode = #tpu.pipeline_mode<synchronous>, transform_indices = @transform_3, window_bounds = array<i64: 8, 128>}]} {
    %c0_i32 = arith.constant 0 : i32
    %0 = arith.cmpi eq, %arg0, %c0_i32 : i32
    %1 = arith.extui %0 : i1 to i32
    %c0_i32_0 = arith.constant 0 : i32
    %2 = arith.cmpi ne, %1, %c0_i32_0 : i32
    scf.if %2 {
      %cst_23 = arith.constant 0.000000e+00 : f32
      %71 = vector.broadcast %cst_23 : f32 to vector<8x128xf32>
      %c0_24 = arith.constant 0 : index
      %c0_25 = arith.constant 0 : index
      %72 = vector.load %arg5[%c0_24, %c0_25] : memref<8x128xf32, #tpu.memory_space<vmem>>, vector<8x128xf32>
      tpu.vector_store %arg5[%c0_24, %c0_25], %71 {strides = array<i32>} : memref<8x128xf32, #tpu.memory_space<vmem>>, vector<8x128xf32>,
      %cst_26 = arith.constant 0.000000e+00 : f32
      %73 = vector.broadcast %cst_26 : f32 to vector<8x128xf32>
      %c0_27 = arith.constant 0 : index
      %c0_28 = arith.constant 0 : index
      %74 = vector.load %arg6[%c0_27, %c0_28] : memref<8x128xf32, #tpu.memory_space<vmem>>, vector<8x128xf32>
      tpu.vector_store %arg6[%c0_27, %c0_28], %73 {strides = array<i32>} : memref<8x128xf32, #tpu.memory_space<vmem>>, vector<8x128xf32>,
    } else {
    }
    %c0 = arith.constant 0 : index
    %c0_1 = arith.constant 0 : index
    %3 = vector.load %arg1[%c0, %c0_1] : memref<8x128xf32, #tpu.memory_space<vmem>>, vector<8x128xf32>
    %c0_2 = arith.constant 0 : index
    %c0_3 = arith.constant 0 : index
    %4 = vector.load %arg2[%c0_2, %c0_3] : memref<1x128xi32, #tpu.memory_space<vmem>>, vector<1x128xi32>
    %5 = tpu.iota {dimensions = array<i32: 0>} : vector<8x128xi32>
    %c7_i32 = arith.constant 7 : i32
    %6 = vector.broadcast %c7_i32 : i32 to vector<8x128xi32>
    %7 = arith.cmpi slt, %5, %6 : vector<8x128xi32>
    %cst = arith.constant -1.000000e+30 : f32
    %8 = vector.broadcast %cst : f32 to vector<8x128xf32>
    %9 = arith.select %7, %3, %8 : vector<8x128xi1>, vector<8x128xf32>
    %10 = tpu.iota {dimensions = array<i32: 1>} : vector<1x128xi32>
    %c128_i32 = arith.constant 128 : i32
    %11 = arith.muli %arg0, %c128_i32 : i32
    %12 = vector.broadcast %11 : i32 to vector<1x128xi32>
    %13 = arith.addi %12, %10 : vector<1x128xi32>
    %c8_i32 = arith.constant 8 : i32
    %14 = vector.broadcast %c8_i32 : i32 to vector<1x128xi32>
    %15 = arith.cmpi slt, %13, %14 : vector<1x128xi32>
    %16 = arith.extui %15 : vector<1x128xi1> to vector<1x128xi32>
    %17 = arith.sitofp %16 : vector<1x128xi32> to vector<1x128xf32>
    %cst_4 = arith.constant dense<0xFF800000> : vector<128xf32>
    %18 = vector.multi_reduction <maximumf>, %9, %cst_4 [0] : vector<8x128xf32> to vector<128xf32>
    %19 = vector.shape_cast %18 : vector<128xf32> to vector<1x128xf32>
    %20 = vector.broadcast %19 : vector<1x128xf32> to vector<8x128xf32>
    %21 = arith.subf %9, %20 : vector<8x128xf32>
    %22 = math.exp %21 : vector<8x128xf32>
    %cst_5 = arith.constant dense<0.000000e+00> : vector<128xf32>
    %23 = vector.multi_reduction <add>, %22, %cst_5 [0] : vector<8x128xf32> to vector<128xf32>
    %24 = vector.shape_cast %23 : vector<128xf32> to vector<1x128xf32>
    %25 = vector.broadcast %24 : vector<1x128xf32> to vector<8x128xf32>
    %26 = arith.divf %22, %25 : vector<8x128xf32>
    %cst_6 = arith.constant 9.99999993E-9 : f32
    %cst_7 = arith.constant 1.000000e+00 : f32
    %27 = vector.broadcast %cst_6 : f32 to vector<8x128xf32>
    %28 = arith.maximumf %27, %26 : vector<8x128xf32>
    %29 = vector.broadcast %cst_7 : f32 to vector<8x128xf32>
    %30 = arith.minimumf %29, %28 : vector<8x128xf32>
    %31 = vector.broadcast %4 : vector<1x128xi32> to vector<8x128xi32>
    %32 = arith.cmpi eq, %5, %31 : vector<8x128xi32>
    %33 = arith.extui %32 : vector<8x128xi1> to vector<8x128xi32>
    %34 = arith.sitofp %33 : vector<8x128xi32> to vector<8x128xf32>
    %35 = arith.mulf %34, %30 : vector<8x128xf32>
    %cst_8 = arith.constant dense<0.000000e+00> : vector<128xf32>
    %36 = vector.multi_reduction <add>, %35, %cst_8 [0] : vector<8x128xf32> to vector<128xf32>
    %37 = vector.shape_cast %36 : vector<128xf32> to vector<1x128xf32>
    %38 = arith.mulf %34, %9 : vector<8x128xf32>
    %cst_9 = arith.constant dense<0.000000e+00> : vector<128xf32>
    %39 = vector.multi_reduction <add>, %38, %cst_9 [0] : vector<8x128xf32> to vector<128xf32>
    %40 = vector.shape_cast %39 : vector<128xf32> to vector<1x128xf32>
    %41 = math.log %24 : vector<1x128xf32>
    %42 = arith.addf %19, %41 : vector<1x128xf32>
    %43 = arith.subf %42, %40 : vector<1x128xf32>
    %44 = vector.broadcast %17 : vector<1x128xf32> to vector<8x128xf32>
    %45 = arith.mulf %30, %44 : vector<8x128xf32>
    %c0_10 = arith.constant 0 : index
    %c0_11 = arith.constant 0 : index
    %46 = vector.load %arg5[%c0_10, %c0_11] : memref<8x128xf32, #tpu.memory_space<vmem>>, vector<8x128xf32>
    %47 = arith.addf %46, %45 : vector<8x128xf32>
    %c0_12 = arith.constant 0 : index
    %c0_13 = arith.constant 0 : index
    %48 = vector.load %arg5[%c0_12, %c0_13] : memref<8x128xf32, #tpu.memory_space<vmem>>, vector<8x128xf32>
    tpu.vector_store %arg5[%c0_12, %c0_13], %47 {strides = array<i32>} : memref<8x128xf32, #tpu.memory_space<vmem>>, vector<8x128xf32>,
    %c0_14 = arith.constant 0 : index
    %c0_15 = arith.constant 0 : index
    %49 = vector.load %arg6[%c0_14, %c0_15] : memref<8x128xf32, #tpu.memory_space<vmem>>, vector<8x128xf32>
    %50 = arith.mulf %45, %45 : vector<8x128xf32>
    %51 = arith.addf %49, %50 : vector<8x128xf32>
    %c0_16 = arith.constant 0 : index
    %c0_17 = arith.constant 0 : index
    %52 = vector.load %arg6[%c0_16, %c0_17] : memref<8x128xf32, #tpu.memory_space<vmem>>, vector<8x128xf32>
    tpu.vector_store %arg6[%c0_16, %c0_17], %51 {strides = array<i32>} : memref<8x128xf32, #tpu.memory_space<vmem>>, vector<8x128xf32>,
    %53 = tpu.iota {dimensions = array<i32: 0>} : vector<3x128xi32>
    %54 = arith.sitofp %4 : vector<1x128xi32> to vector<1x128xf32>
    %c0_i32_18 = arith.constant 0 : i32
    %55 = vector.broadcast %c0_i32_18 : i32 to vector<3x128xi32>
    %56 = arith.cmpi eq, %53, %55 : vector<3x128xi32>
    %c1_i32 = arith.constant 1 : i32
    %57 = vector.broadcast %c1_i32 : i32 to vector<3x128xi32>
    %58 = arith.cmpi eq, %53, %57 : vector<3x128xi32>
    %59 = vector.shape_cast %37 : vector<1x128xf32> to vector<1x128xf32>
    %60 = vector.broadcast %59 : vector<1x128xf32> to vector<3x128xf32>
    %61 = vector.shape_cast %54 : vector<1x128xf32> to vector<1x128xf32>
    %62 = vector.broadcast %61 : vector<1x128xf32> to vector<3x128xf32>
    %63 = arith.select %58, %60, %62 : vector<3x128xi1>, vector<3x128xf32>
    %64 = vector.shape_cast %43 : vector<1x128xf32> to vector<1x128xf32>
    %65 = vector.broadcast %64 : vector<1x128xf32> to vector<3x128xf32>
    %66 = arith.select %56, %65, %63 : vector<3x128xi1>, vector<3x128xf32>
    %c0_19 = arith.constant 0 : index
    %c0_20 = arith.constant 0 : index
    %67 = vector.load %arg3[%c0_19, %c0_20] : memref<3x128xf32, #tpu.memory_space<vmem>>, vector<3x128xf32>
    tpu.vector_store %arg3[%c0_19, %c0_20], %66 {strides = array<i32>} : memref<3x128xf32, #tpu.memory_space<vmem>>, vector<3x128xf32>,
    %c0_i32_21 = arith.constant 0 : i32
    %68 = arith.cmpi eq, %arg0, %c0_i32_21 : i32
    %69 = arith.extui %68 : i1 to i32
    %c0_i32_22 = arith.constant 0 : i32
    %70 = arith.cmpi ne, %69, %c0_i32_22 : i32
    scf.if %70 {
      %c0_23 = arith.constant 0 : index
      %c0_24 = arith.constant 0 : index
      %71 = vector.load %arg5[%c0_23, %c0_24] : memref<8x128xf32, #tpu.memory_space<vmem>>, vector<8x128xf32>
      %cst_25 = arith.constant dense<0.000000e+00> : vector<8xf32>
      %72 = vector.multi_reduction <add>, %71, %cst_25 [1] : vector<8x128xf32> to vector<8xf32>
      %73 = vector.shape_cast %72 : vector<8xf32> to vector<8x1xf32>
      %c0_26 = arith.constant 0 : index
      %c0_27 = arith.constant 0 : index
      %74 = vector.load %arg6[%c0_26, %c0_27] : memref<8x128xf32, #tpu.memory_space<vmem>>, vector<8x128xf32>
      %cst_28 = arith.constant dense<0.000000e+00> : vector<8xf32>
      %75 = vector.multi_reduction <add>, %74, %cst_28 [1] : vector<8x128xf32> to vector<8xf32>
      %76 = vector.shape_cast %75 : vector<8xf32> to vector<8x1xf32>
      %cst_29 = arith.constant 8.000000e+00 : f32
      %77 = vector.broadcast %cst_29 : f32 to vector<8x1xf32>
      %78 = arith.divf %73, %77 : vector<8x1xf32>
      %cst_30 = arith.constant 8.000000e+00 : f32
      %79 = vector.broadcast %cst_30 : f32 to vector<8x1xf32>
      %80 = arith.mulf %79, %78 : vector<8x1xf32>
      %81 = arith.mulf %80, %78 : vector<8x1xf32>
      %82 = arith.subf %76, %81 : vector<8x1xf32>
      %cst_31 = arith.constant 7.000000e+00 : f32
      %83 = vector.broadcast %cst_31 : f32 to vector<8x1xf32>
      %84 = arith.divf %82, %83 : vector<8x1xf32>
      %cst_32 = arith.constant 0.000000e+00 : f32
      %85 = vector.broadcast %cst_32 : f32 to vector<8x1xf32>
      %86 = arith.maximumf %84, %85 : vector<8x1xf32>
      %87 = math.sqrt %86 : vector<8x1xf32>
      %88 = tpu.iota {dimensions = array<i32: 1>} : vector<8x128xi32>
      %c0_i32_33 = arith.constant 0 : i32
      %89 = vector.broadcast %c0_i32_33 : i32 to vector<8x128xi32>
      %90 = arith.cmpi eq, %88, %89 : vector<8x128xi32>
      %c1_i32_34 = arith.constant 1 : i32
      %91 = vector.broadcast %c1_i32_34 : i32 to vector<8x128xi32>
      %92 = arith.cmpi eq, %88, %91 : vector<8x128xi32>
      %cst_35 = arith.constant 0.000000e+00 : f32
      %93 = vector.shape_cast %87 : vector<8x1xf32> to vector<8x1xf32>
      %94 = vector.broadcast %93 : vector<8x1xf32> to vector<8x128xf32>
      %95 = vector.broadcast %cst_35 : f32 to vector<8x128xf32>
      %96 = arith.select %92, %94, %95 : vector<8x128xi1>, vector<8x128xf32>
      %97 = vector.shape_cast %78 : vector<8x1xf32> to vector<8x1xf32>
      %98 = vector.broadcast %97 : vector<8x1xf32> to vector<8x128xf32>
      %99 = arith.select %90, %98, %96 : vector<8x128xi1>, vector<8x128xf32>
      %c0_36 = arith.constant 0 : index
      %c0_37 = arith.constant 0 : index
      %100 = vector.load %arg4[%c0_36, %c0_37] : memref<8x128xf32, #tpu.memory_space<vmem>>, vector<8x128xf32>
      tpu.vector_store %arg4[%c0_36, %c0_37], %99 {strides = array<i32>} : memref<8x128xf32, #tpu.memory_space<vmem>>, vector<8x128xf32>,
    } else {
    }
    return
  }
  func.func @transform_0(%arg0: i32) -> (i32, i32) {
    %c0_i32 = arith.constant 0 : i32
    %c0_i32_0 = arith.constant 0 : i32
    return %c0_i32, %arg0 : i32, i32
  }
  func.func @transform_1(%arg0: i32) -> (i32, i32) {
    %c0_i32 = arith.constant 0 : i32
    %c0_i32_0 = arith.constant 0 : i32
    return %c0_i32, %arg0 : i32, i32
  }
  func.func @transform_2(%arg0: i32) -> (i32, i32) {
    %c0_i32 = arith.constant 0 : i32
    %c0_i32_0 = arith.constant 0 : i32
    return %c0_i32, %arg0 : i32, i32
  }
  func.func @transform_3(%arg0: i32) -> (i32, i32) {
    %c0_i32 = arith.constant 0 : i32
    %c0_i32_0 = arith.constant 0 : i32
    %c0_i32_1 = arith.constant 0 : i32
    return %c0_i32, %c0_i32_0 : i32, i32
  }
}

</mosaic_0001>

<llo_original>
// kernel: tpu_custom_call.1
$region0: #{tpu_custom_call.1}
  #allocation0 [shape = 'u32[]', space=smem, size = 0x4, offset = 0x4, fixed_abs, tag = 'smem constant byte address 0x4 - core index']
  #allocation1 [shape = 'u32[144,128]{1,0:T(1,128)}', space=vmem, size = 0x12000, scoped, tag = 'internal scratch']
  #allocation2 [shape = 'f32[8,128]{1,0:T(8,128)}', space=vmem, size = 0x1000, scoped, tag = 'scratch operand']
  #allocation3 [shape = 'f32[8,128]{1,0:T(8,128)}', space=vmem, size = 0x1000, scoped, tag = 'scratch operand']
  %s0 = inlined_call_operand.hbm [shape: f32[8,128], index: 0, kind: input, shape index: {}]
  %s1 = inlined_call_operand.vmem [shape: s32[1,128], index: 1, kind: input, shape index: {}]
  %s2 = inlined_call_operand.hbm [shape: f32[3,128], index: 2, kind: output, shape index: {0}]
  %s3 = inlined_call_operand.hbm [shape: f32[8,128], index: 3, kind: output, shape index: {1}]
  %4 = xla_tuple %s2, %s3
  %s5 = sld [smem:[#allocation0]]
  $region38: #{tpu_custom_call.1} parent=0
    _
  %s7 = ssub.s32 1, %s5
  %s8 = scalar_select 0, %s7, %s5
  $region1: #{tpu_custom_call.1} parent=0
    #allocation4 [shape = 'u8[4096]{0}', space=vmem, size = 0x1000, scoped, tag = 'input window, operand 0, single buffered']
    #allocation5 [shape = 's32[1]{0}', space=sflag, size = 0x4, scoped, tag = 'scoped memory for tpu_custom_call.1']
    #allocation6 [shape = 's32[1]{0}', space=sflag, size = 0x4, scoped, tag = 'scoped memory for tpu_custom_call.1']
    #allocation7 [shape = 'u8[2048]{0}', space=vmem, size = 0x800, scoped, tag = 'output window, operand 0, single buffered']
    #allocation8 [shape = 'u8[4096]{0}', space=vmem, size = 0x1000, scoped, tag = 'output window, operand 1, single buffered']
    #allocation9 [shape = 's32[1]{0}', space=sflag, size = 0x4, scoped, tag = 'scoped memory for tpu_custom_call.1']
    %9 = vsyncpa [#allocation5], 0
    %10 = vsyncpa [#allocation6], 0
    %11 = vsyncpa [#allocation9], 0
    // Predicated region
    $region2: #{tpu_custom_call.1} parent=1 // pred_check
      _
    $region3: #{tpu_custom_call.1} parent=1 // pred_check_branch
      %13 = sbr.rel (0) target = $region5
    $region4: #{tpu_custom_call.1} parent=1 // pred_region
      %s15 = ssub.s32 128, 128
      %16 = vsyncadd [#allocation5], %s15
      %s18 = sshll.u32 [#allocation4], 4
      %s19 = int_to_ptr.vmem [resolvable:$true] %s18
      %21 = dma.hbm_to_vmem [thread:$0]  %s0, 128, %s19, [#allocation5]
    $region5: #{tpu_custom_call.1} parent=1 // pred_fallthru
      _
    // Predicated region
    $region6: #{tpu_custom_call.1} parent=1 // pred_check
      _
    $region7: #{tpu_custom_call.1} parent=1 // pred_check_branch
      %23 = sbr.rel (0) target = $region9
    $region8: #{tpu_custom_call.1} parent=1 // pred_region
      _
    $region9: #{tpu_custom_call.1} parent=1 // pred_fallthru
      _
    // Predicated region
    $region10: #{tpu_custom_call.1} parent=1 // pred_check
      _
    $region11: #{tpu_custom_call.1} parent=1 // pred_check_branch
      %25 = sbr.rel (0) target = $region13
    $region12: #{tpu_custom_call.1} parent=1 // pred_region
      %26 = dma.done [#allocation5], 128
    $region13: #{tpu_custom_call.1} parent=1 // pred_fallthru
      _
    %p27 = scmp.eq.s32.totalorder 0, 0
    // Predicated region
    $region14: #{tpu_custom_call.1} parent=1 // pred_check
      %p28 = pneg %p27
    $region15: #{tpu_custom_call.1} parent=1 // pred_check_branch
      %30 = sbr.rel (%p28) target = $region17
    $region16: #{tpu_custom_call.1} parent=1 // pred_region
      %31 = vst [vmem:[#allocation2] sm:$0xff] 0.0
      %32 = vst [vmem:[#allocation3] sm:$0xff] 0.0
    $region17: #{tpu_custom_call.1} parent=1 // pred_fallthru
      _
    %v33 = vld [vmem:[#allocation4] sm:$0xff]
    %v34 = vld [vmem:[%s1] sm:$0x1]
    %v35 = vlaneseq
    %v36 = vshrl.u32 %v35, 7
    %vm37 = vcmp.lt.s32.totalorder %v36, 7
    %v38 = vsel %vm37, %v33, -1e+30
    %v39 = vlaneseq
    %v40 = vand.u32 %v39, 127
    %s41 = smul.u32 0, 128
    %v42 = vstv %s41
    %v43 = vadd.s32 %v42, %v40
    %vm44 = vcmp.lt.s32.totalorder %v43, 8
    %v45 = vsel %vm44, 1, 0
    %v46 = vcvt.s32.f32 %v45
    %v47 = vrot.slane %v38, 4
    %v48 = vmax.f32 %v38, %v47
    %v49 = vrot.slane %v48, 2
    %v50 = vmax.f32 %v48, %v49
    %v51 = vrot.slane %v50, 1
    %v52 = vmax.f32 %v50, %v51
    %v53 = vsub.f32 %v38, %v52
    %v54 = vmul.f32 %v53, 1.442695
    %v55 = vpow.pop %v54
    %v56 = vrot.slane %v55, 4
    %v57 = vadd.f32 %v55, %v56
    %v58 = vrot.slane %v57, 2
    %v59 = vadd.f32 %v57, %v58
    %v60 = vrot.slane %v59, 1
    %v61 = vadd.f32 %v59, %v60
    %v62 = vrcp.pop %v61
    %v63 = vmul.f32 %v55, %v62
    %v64 = vmax.f32 %v63, 1e-08
    %v65 = vmin.f32 %v64, 1.0
    %v66 = vlaneseq
    %v67 = vshrl.u32 %v66, 7
    %v68 = vsub.s32 0, %v67
    %v69 = vrot.slane %v34, %v68
    %vm70 = vcmp.eq.s32.totalorder %v36, %v69
    %v71 = vsel %vm70, 1, 0
    %v72 = vcvt.s32.f32 %v71
    %v73 = vmul.f32 %v72, %v65
    %v74 = vrot.slane %v73, 4
    %v75 = vadd.f32 %v73, %v74
    %v76 = vrot.slane %v75, 2
    %v77 = vadd.f32 %v75, %v76
    %v78 = vrot.slane %v77, 1
    %v79 = vadd.f32 %v77, %v78
    %v80 = vmul.f32 %v72, %v38
    %v81 = vrot.slane %v80, 4
    %v82 = vadd.f32 %v80, %v81
    %v83 = vrot.slane %v82, 2
    %v84 = vadd.f32 %v82, %v83
    %v85 = vrot.slane %v84, 1
    %v86 = vadd.f32 %v84, %v85
    %v87 = vlog2.pop %v61
    %v88 = vmul.f32 %v87, 0.6931472
    %v89 = vadd.f32 %v52, %v88
    %v90 = vsub.f32 %v89, %v86
    %v91 = vmul.f32 %v65, %v46
    %v92 = vld [vmem:[#allocation2] sm:$0xff]
    %v93 = vadd.f32 %v92, %v91
    %94 = vst [vmem:[#allocation2] sm:$0xff] %v93
    %v95 = vld [vmem:[#allocation3] sm:$0xff]
    %v96 = vmul.f32 %v91, %v91
    %v97 = vadd.f32 %v95, %v96
    %98 = vst [vmem:[#allocation3] sm:$0xff] %v97
    %v99 = vcvt.s32.f32 %v34
    %vm100 = vcmp.eq.s32.totalorder %v36, 0
    %vm101 = vcmp.eq.s32.totalorder %v36, 1
    %v103 = vlaneseq
    %v104 = vshrl.u32 %v103, 7
    %v105 = vsub.s32 0, %v104
    %v106 = vrot.slane %v99, %v105
    %v108 = vsel %vm101, %v79, %v106
    %v109 = vsel %vm100, %v90, %v108
    %110 = vst [vmem:[#allocation7] sm:$0x7] %v109
    // Predicated region
    $region18: #{tpu_custom_call.1} parent=1 // pred_check
      %p111 = pneg %p27
    $region19: #{tpu_custom_call.1} parent=1 // pred_check_branch
      %113 = sbr.rel (%p111) target = $region21
    $region20: #{tpu_custom_call.1} parent=1 // pred_region
      %v114 = vld [vmem:[#allocation2] sm:$0xff]
      %115 = vadd.xlane.f32.xlu0 %v114
      %v116 = vpop.xlane.xlu0 %115
      %v117 = vld [vmem:[#allocation3] sm:$0xff]
      %118 = vadd.xlane.f32.xlu0 %v117
      %v119 = vpop.xlane.xlu0 %118
      %v120 = vrcp.pop 8.0
      %v121 = vmul.f32 %v116, %v120
      %v122 = vmul.f32 %v121, 8.0
      %v123 = vmul.f32 %v122, %v121
      %v124 = vsub.f32 %v119, %v123
      %v125 = vrcp.pop 7.0
      %v126 = vmul.f32 %v124, %v125
      %v127 = vmax.f32 %v126, 0.0
      %v128 = vrsqrt.pop %v127
      %v129 = vmul.f32 %v127, %v128
      %vm130 = vcmp.eq.f32.partialorder %v127, inf
      %v131 = vsel %vm130, %v127, %v129
      %vm132 = vcmp.eq.f32.partialorder %v127, 0.0
      %v133 = vand.u32 %v127, 2147483648
      %v134 = vsel %vm132, %v133, %v131
      %vm135 = vcmp.eq.s32.totalorder %v40, 0
      %vm136 = vcmp.eq.s32.totalorder %v40, 1
      %v137 = vsel %vm136, %v134, 0.0
      %v138 = vsel %vm135, %v121, %v137
      %139 = vst [vmem:[#allocation8] sm:$0xff] %v138
    $region21: #{tpu_custom_call.1} parent=1 // pred_fallthru
      _
    // Predicated region
    $region22: #{tpu_custom_call.1} parent=1 // pred_check
      _
    $region23: #{tpu_custom_call.1} parent=1 // pred_check_branch
      %141 = sbr.rel (0) target = $region25
    $region24: #{tpu_custom_call.1} parent=1 // pred_region
      %s143 = ssub.s32 64, 64
      %144 = vsyncadd [#allocation6], %s143
      %s146 = sshll.u32 [#allocation7], 4
      %s147 = int_to_ptr.vmem [resolvable:$true] %s146
      %149 = dma.vmem_to_hbm [thread:$0]  %s147, 64, %s2, [#allocation6]
    $region25: #{tpu_custom_call.1} parent=1 // pred_fallthru
      _
    // Predicated region
    $region26: #{tpu_custom_call.1} parent=1 // pred_check
      _
    $region27: #{tpu_custom_call.1} parent=1 // pred_check_branch
      %151 = sbr.rel (0) target = $region29
    $region28: #{tpu_custom_call.1} parent=1 // pred_region
      %s153 = ssub.s32 128, 128
      %154 = vsyncadd [#allocation9], %s153
      %s156 = sshll.u32 [#allocation8], 4
      %s157 = int_to_ptr.vmem [resolvable:$true] %s156
      %159 = dma.vmem_to_hbm [thread:$0]  %s157, 128, %s3, [#allocation9]
    $region29: #{tpu_custom_call.1} parent=1 // pred_fallthru
      _
    // Predicated region
    $region30: #{tpu_custom_call.1} parent=1 // pred_check
      _
    $region31: #{tpu_custom_call.1} parent=1 // pred_check_branch
      %161 = sbr.rel (0) target = $region33
    $region32: #{tpu_custom_call.1} parent=1 // pred_region
      %162 = dma.done [#allocation6], 64
    $region33: #{tpu_custom_call.1} parent=1 // pred_fallthru
      _
    // Predicated region
    $region34: #{tpu_custom_call.1} parent=1 // pred_check
      _
    $region35: #{tpu_custom_call.1} parent=1 // pred_check_branch
      %164 = sbr.rel (0) target = $region37
    $region36: #{tpu_custom_call.1} parent=1 // pred_region
      %165 = dma.done [#allocation9], 128
    $region37: #{tpu_custom_call.1} parent=1 // pred_fallthru
      _
    %166 = vsyncpa [#allocation5], 1
    %167 = vsyncpa [#allocation6], 1
    %168 = vsyncpa [#allocation9], 1

</llo_original>
